<compile_context>
chip_gen: v7x
topology: tpu7x:2x2x1
jax: 0.10.0
libtpu: 0.0.40
codegen_flags: <defaults>
</compile_context>

<pallas_src>
import functools

import jax
import jax.numpy as jnp
from jax.experimental import pallas as pl
from jax.experimental.pallas import tpu as pltpu


def _gated_fusion_kernel(m_ref, v_ref, t_ref, p_ref, o_ref, *, eps, inv_h):
    # Load the (tm, H) tiles; statistics and affine math in f32.
    m = m_ref[...].astype(jnp.float32)
    vt = v_ref[...].astype(jnp.float32) + t_ref[...].astype(jnp.float32)

    p = p_ref[...]                                 # (3, H) f32: [w1; w2; b1+b2]
    w1, w2, b12 = p[0:1, :], p[1:2, :], p[2:3, :]

    def normalize(x):
        # Two-pass statistics (matches torch.nn.LayerNorm; avoids the
        # E[x^2] - mu^2 catastrophic-cancellation failure mode).
        mu = jnp.sum(x, axis=-1, keepdims=True) * inv_h
        d = x - mu
        var = jnp.sum(d * d, axis=-1, keepdims=True) * inv_h
        return d * jax.lax.rsqrt(var + eps)

    # out = LN1(m)*w1 + b1 + LN2(v+t)*w2 + b2, with b1+b2 pre-folded.
    # TODO(synk): training-mode Dropout (stochastic masking) not implemented;
    # this matches eval() semantics.
    o_ref[...] = (normalize(m) * w1 + normalize(vt) * w2 + b12).astype(o_ref.dtype)


def _round_up(x, m):
    return ((x + m - 1) // m) * m


def _vmem_capacity_bytes():
    try:
        return int(pltpu.get_tpu_info().vmem_capacity_bytes)
    except Exception:
        # Conservative fallback: v7x per-TensorCore VMEM (smallest generation).
        return 64 * 1024 * 1024


def _choose_tm(n_rows, hidden, itemsize):
    """Row tile: big enough for the HBM roofline, small enough for VMEM and
    to give the pipeline several grid steps of overlap."""
    # Sub-32-bit dtypes pack 2+ rows per sublane -> keep tm a multiple of 16.
    mult = 8 if itemsize >= 4 else 16
    if n_rows < mult:
        # Single block equal to the full row extent (allowed by BlockSpec).
        return n_rows

    # Bytes of VMEM per row of tile:
    #   pipeline streams: (3 inputs + 1 output) x 2 buffers at input width,
    #   plus ~5 live f32 (tm, H) intermediates inside the kernel body.
    per_row = (4 * 2 * itemsize + 5 * 4) * hidden
    budget = _vmem_capacity_bytes() // 2
    cap = max(mult, (budget // max(per_row, 1)) // mult * mult)
    tm = min(1024, cap)

    # Aim for >= 8 grid steps (>= 4 per v7x TensorCore) without dropping below
    # ~256 rows per tile (the measured roofline knee).
    want = _round_up(max(256, pl.cdiv(n_rows, 8)), mult)
    tm = min(tm, want)

    # Never exceed the array extent; keep tm a multiple of `mult` and let the
    # ragged remainder become a masked partial last block.
    tm = min(tm, (n_rows // mult) * mult)
    return max(tm, mult)


def gated_fusion(mention, vision, text, params, *, eps=1e-5, tm=None):
    """mention/vision/text: [batch, seq, hidden].  Returns same shape/dtype."""
    B, S, H = mention.shape
    N = B * S
    itemsize = jnp.dtype(mention.dtype).itemsize

    if tm is None:
        tm = _choose_tm(N, H, itemsize)
    grid = (pl.cdiv(N, tm),)

    m2 = mention.reshape(N, H)
    v2 = vision.reshape(N, H)
    t2 = text.reshape(N, H)

    # Stack LayerNorm params into one (3, H) slab: [w_seq; w_extra; b_seq+b_extra].
    p3 = jnp.stack(
        [params["ln_seq_w"], params["ln_extra_w"],
         params["ln_seq_b"] + params["ln_extra_b"]], axis=0
    ).astype(jnp.float32)

    row_spec = pl.BlockSpec((tm, H), lambda i: (i, 0))
    par_spec = pl.BlockSpec((3, H), lambda i: (0, 0))

    vmem_limit = max(32 * 1024 * 1024,
                     min(int(_vmem_capacity_bytes() * 0.625), 64 * 1024 * 1024))

    out = pl.pallas_call(
        functools.partial(_gated_fusion_kernel, eps=float(eps), inv_h=1.0 / H),
        out_shape=jax.ShapeDtypeStruct((N, H), mention.dtype),
        grid_spec=pltpu.PrefetchScalarGridSpec(
            num_scalar_prefetch=0,
            grid=grid,
            in_specs=[row_spec, row_spec, row_spec, par_spec],
            out_specs=row_spec,
        ),
        compiler_params=pltpu.CompilerParams(
            dimension_semantics=("parallel",),
            vmem_limit_bytes=vmem_limit,
        ),
    )(m2, v2, t2, p3)

    return out.reshape(B, S, H)


def _reference(mention, vision, text, params, eps=1e-5):
    def ln(x, w, b):
        x = x.astype(jnp.float32)
        mu = jnp.mean(x, axis=-1, keepdims=True)
        var = jnp.mean((x - mu) ** 2, axis=-1, keepdims=True)
        return (x - mu) / jnp.sqrt(var + eps) * w + b
    return (ln(mention, params["ln_seq_w"], params["ln_seq_b"])
            + ln(vision.astype(jnp.float32) + text.astype(jnp.float32),
                 params["ln_extra_w"], params["ln_extra_b"])).astype(mention.dtype)


if __name__ == "__main__":
    key = jax.random.PRNGKey(0)
    B, S, H = 2, 8, 32   # batch, seq, hidden_size

    k_m, k_v, k_t, k_w1, k_b1, k_w2, k_b2 = jax.random.split(key, 7)
    mention = jax.random.normal(k_m, (B, S, H), dtype=jnp.float32)
    vision = jax.random.normal(k_v, (B, S, H), dtype=jnp.float32)
    text = jax.random.normal(k_t, (B, S, H), dtype=jnp.float32)

    # PyTorch default init is w=1, b=0; perturb to exercise the affine path.
    params = {
        "ln_seq_w": 1.0 + 0.1 * jax.random.normal(k_w1, (H,), dtype=jnp.float32),
        "ln_seq_b": 0.1 * jax.random.normal(k_b1, (H,), dtype=jnp.float32),
        "ln_extra_w": 1.0 + 0.1 * jax.random.normal(k_w2, (H,), dtype=jnp.float32),
        "ln_extra_b": 0.1 * jax.random.normal(k_b2, (H,), dtype=jnp.float32),
    }

    out = gated_fusion(mention, vision, text, params)
    out = jax.block_until_ready(out)

    ref = _reference(mention, vision, text, params)
    assert out.shape == (B, S, H)
    assert jnp.allclose(out, ref, atol=1e-5, rtol=1e-5), "mismatch vs reference"

    # Non-divisible row count -> exercises the masked partial last block.
    B2, S2 = 3, 7
    m2 = jax.random.normal(k_m, (B2, S2, H), dtype=jnp.float32)
    v2 = jax.random.normal(k_v, (B2, S2, H), dtype=jnp.float32)
    t2 = jax.random.normal(k_t, (B2, S2, H), dtype=jnp.float32)
    out2 = jax.block_until_ready(gated_fusion(m2, v2, t2, params))
    ref2 = _reference(m2, v2, t2, params)
    assert jnp.allclose(out2, ref2, atol=1e-5, rtol=1e-5), "mismatch (ragged)"

    # Large-mean inputs -> exercises LayerNorm numerics (two-pass variance).
    m3 = mention + 100.0
    out3 = jax.block_until_ready(gated_fusion(m3, vision, text, params))
    ref3 = _reference(m3, vision, text, params)
    assert jnp.allclose(out3, ref3, atol=1e-4, rtol=1e-4), "mismatch (large mean)"

    print("KERNEL_OK")
</pallas_src>

<mosaic_0001>
module attributes {stable_mosaic.version = 11 : i64} {
  func.func @_gated_fusion_kernel(%arg0: i32, %arg1: memref<16x32xf32, #tpu.memory_space<vmem>>, %arg2: memref<16x32xf32, #tpu.memory_space<vmem>>, %arg3: memref<16x32xf32, #tpu.memory_space<vmem>>, %arg4: memref<3x32xf32, #tpu.memory_space<vmem>>, %arg5: memref<16x32xf32, #tpu.memory_space<vmem>>) attributes {dimension_semantics = [#tpu.dimension_semantics<parallel>], iteration_bounds = array<i64: 1>, scalar_prefetch = 0 : i64, scratch_operands = 0 : i64, tpu.core_type = #tpu.core_type<tc>, window_params = [{transform_indices = @transform_0, window_bounds = array<i64: 16, 32>}, {transform_indices = @transform_1, window_bounds = array<i64: 16, 32>}, {transform_indices = @transform_2, window_bounds = array<i64: 16, 32>}, {pipeline_mode = #tpu.pipeline_mode<synchronous>, transform_indices = @transform_3, window_bounds = array<i64: 3, 32>}, {transform_indices = @transform_4, window_bounds = array<i64: 16, 32>}]} {
    %c0 = arith.constant 0 : index
    %c0_0 = arith.constant 0 : index
    %0 = vector.load %arg1[%c0, %c0_0] : memref<16x32xf32, #tpu.memory_space<vmem>>, vector<16x32xf32>
    %c0_1 = arith.constant 0 : index
    %c0_2 = arith.constant 0 : index
    %1 = vector.load %arg2[%c0_1, %c0_2] : memref<16x32xf32, #tpu.memory_space<vmem>>, vector<16x32xf32>
    %c0_3 = arith.constant 0 : index
    %c0_4 = arith.constant 0 : index
    %2 = vector.load %arg3[%c0_3, %c0_4] : memref<16x32xf32, #tpu.memory_space<vmem>>, vector<16x32xf32>
    %3 = arith.addf %1, %2 : vector<16x32xf32>
    %c0_5 = arith.constant 0 : index
    %c0_6 = arith.constant 0 : index
    %4 = vector.load %arg4[%c0_5, %c0_6] : memref<3x32xf32, #tpu.memory_space<vmem>>, vector<3x32xf32>
    %5 = vector.extract_strided_slice %4 {offsets = [0, 0], sizes = [1, 32], strides = [1, 1]} : vector<3x32xf32> to vector<1x32xf32>
    %6 = vector.extract_strided_slice %4 {offsets = [1, 0], sizes = [1, 32], strides = [1, 1]} : vector<3x32xf32> to vector<1x32xf32>
    %7 = vector.extract_strided_slice %4 {offsets = [2, 0], sizes = [1, 32], strides = [1, 1]} : vector<3x32xf32> to vector<1x32xf32>
    %cst = arith.constant dense<0.000000e+00> : vector<16xf32>
    %8 = vector.multi_reduction <add>, %0, %cst [1] : vector<16x32xf32> to vector<16xf32>
    %9 = vector.shape_cast %8 : vector<16xf32> to vector<16x1xf32>
    %cst_7 = arith.constant 3.125000e-02 : f32
    %10 = vector.broadcast %cst_7 : f32 to vector<16x1xf32>
    %11 = arith.mulf %9, %10 : vector<16x1xf32>
    %12 = vector.broadcast %11 : vector<16x1xf32> to vector<16x32xf32>
    %13 = arith.subf %0, %12 : vector<16x32xf32>
    %14 = arith.mulf %13, %13 : vector<16x32xf32>
    %cst_8 = arith.constant dense<0.000000e+00> : vector<16xf32>
    %15 = vector.multi_reduction <add>, %14, %cst_8 [1] : vector<16x32xf32> to vector<16xf32>
    %16 = vector.shape_cast %15 : vector<16xf32> to vector<16x1xf32>
    %cst_9 = arith.constant 3.125000e-02 : f32
    %17 = vector.broadcast %cst_9 : f32 to vector<16x1xf32>
    %18 = arith.mulf %16, %17 : vector<16x1xf32>
    %cst_10 = arith.constant 9.99999974E-6 : f32
    %19 = vector.broadcast %cst_10 : f32 to vector<16x1xf32>
    %20 = arith.addf %18, %19 : vector<16x1xf32>
    %21 = math.rsqrt %20 : vector<16x1xf32>
    %22 = vector.broadcast %21 : vector<16x1xf32> to vector<16x32xf32>
    %23 = arith.mulf %13, %22 : vector<16x32xf32>
    %24 = vector.broadcast %5 : vector<1x32xf32> to vector<16x32xf32>
    %25 = arith.mulf %23, %24 : vector<16x32xf32>
    %cst_11 = arith.constant dense<0.000000e+00> : vector<16xf32>
    %26 = vector.multi_reduction <add>, %3, %cst_11 [1] : vector<16x32xf32> to vector<16xf32>
    %27 = vector.shape_cast %26 : vector<16xf32> to vector<16x1xf32>
    %cst_12 = arith.constant 3.125000e-02 : f32
    %28 = vector.broadcast %cst_12 : f32 to vector<16x1xf32>
    %29 = arith.mulf %27, %28 : vector<16x1xf32>
    %30 = vector.broadcast %29 : vector<16x1xf32> to vector<16x32xf32>
    %31 = arith.subf %3, %30 : vector<16x32xf32>
    %32 = arith.mulf %31, %31 : vector<16x32xf32>
    %cst_13 = arith.constant dense<0.000000e+00> : vector<16xf32>
    %33 = vector.multi_reduction <add>, %32, %cst_13 [1] : vector<16x32xf32> to vector<16xf32>
    %34 = vector.shape_cast %33 : vector<16xf32> to vector<16x1xf32>
    %cst_14 = arith.constant 3.125000e-02 : f32
    %35 = vector.broadcast %cst_14 : f32 to vector<16x1xf32>
    %36 = arith.mulf %34, %35 : vector<16x1xf32>
    %cst_15 = arith.constant 9.99999974E-6 : f32
    %37 = vector.broadcast %cst_15 : f32 to vector<16x1xf32>
    %38 = arith.addf %36, %37 : vector<16x1xf32>
    %39 = math.rsqrt %38 : vector<16x1xf32>
    %40 = vector.broadcast %39 : vector<16x1xf32> to vector<16x32xf32>
    %41 = arith.mulf %31, %40 : vector<16x32xf32>
    %42 = vector.broadcast %6 : vector<1x32xf32> to vector<16x32xf32>
    %43 = arith.mulf %41, %42 : vector<16x32xf32>
    %44 = arith.addf %25, %43 : vector<16x32xf32>
    %45 = vector.broadcast %7 : vector<1x32xf32> to vector<16x32xf32>
    %46 = arith.addf %44, %45 : vector<16x32xf32>
    %c0_16 = arith.constant 0 : index
    %c0_17 = arith.constant 0 : index
    %47 = vector.load %arg5[%c0_16, %c0_17] : memref<16x32xf32, #tpu.memory_space<vmem>>, vector<16x32xf32>
    tpu.vector_store %arg5[%c0_16, %c0_17], %46 {strides = array<i32>} : memref<16x32xf32, #tpu.memory_space<vmem>>, vector<16x32xf32>,
    return
  }
  func.func @transform_0(%arg0: i32) -> (i32, i32) {
    %c0_i32 = arith.constant 0 : i32
    %c0_i32_0 = arith.constant 0 : i32
    return %arg0, %c0_i32 : i32, i32
  }
  func.func @transform_1(%arg0: i32) -> (i32, i32) {
    %c0_i32 = arith.constant 0 : i32
    %c0_i32_0 = arith.constant 0 : i32
    return %arg0, %c0_i32 : i32, i32
  }
  func.func @transform_2(%arg0: i32) -> (i32, i32) {
    %c0_i32 = arith.constant 0 : i32
    %c0_i32_0 = arith.constant 0 : i32
    return %arg0, %c0_i32 : i32, i32
  }
  func.func @transform_3(%arg0: i32) -> (i32, i32) {
    %c0_i32 = arith.constant 0 : i32
    %c0_i32_0 = arith.constant 0 : i32
    %c0_i32_1 = arith.constant 0 : i32
    return %c0_i32, %c0_i32_0 : i32, i32
  }
  func.func @transform_4(%arg0: i32) -> (i32, i32) {
    %c0_i32 = arith.constant 0 : i32
    %c0_i32_0 = arith.constant 0 : i32
    return %arg0, %c0_i32 : i32, i32
  }
}

</mosaic_0001>

<llo_original>
// kernel: tpu_custom_call.1
$region0: #{tpu_custom_call.1}
  #allocation0 [shape = 'u32[]', space=smem, size = 0x4, offset = 0x4, fixed_abs, tag = 'smem constant byte address 0x4 - core index']
  #allocation1 [shape = 'u32[144,128]{1,0:T(1,128)}', space=vmem, size = 0x12000, scoped, tag = 'internal scratch']
  %s0 = inlined_call_operand.hbm [shape: f32[16,32], index: 0, kind: input, shape index: {}]
  %s1 = inlined_call_operand.hbm [shape: f32[16,32], index: 1, kind: input, shape index: {}]
  %s2 = inlined_call_operand.hbm [shape: f32[16,32], index: 2, kind: input, shape index: {}]
  %s3 = inlined_call_operand.vmem [shape: f32[3,32], index: 3, kind: input, shape index: {}]
  %s4 = inlined_call_operand.hbm [shape: f32[16,32], index: 4, kind: output, shape index: {}]
  %s5 = sld [smem:[#allocation0]]
  $region38: #{tpu_custom_call.1} parent=0
    _
  %s7 = ssub.s32 1, %s5
  %s8 = scalar_select 0, %s7, %s5
  $region1: #{tpu_custom_call.1} parent=0
    #allocation2 [shape = 'u8[8192]{0}', space=vmem, size = 0x2000, scoped, tag = 'input window, operand 0, single buffered']
    #allocation3 [shape = 's32[1]{0}', space=sflag, size = 0x4, scoped, tag = 'scoped memory for tpu_custom_call.1']
    #allocation4 [shape = 's32[1]{0}', space=sflag, size = 0x4, scoped, tag = 'scoped memory for tpu_custom_call.1']
    #allocation5 [shape = 'u8[8192]{0}', space=vmem, size = 0x2000, scoped, tag = 'input window, operand 1, single buffered']
    #allocation6 [shape = 's32[1]{0}', space=sflag, size = 0x4, scoped, tag = 'scoped memory for tpu_custom_call.1']
    #allocation7 [shape = 'u8[8192]{0}', space=vmem, size = 0x2000, scoped, tag = 'input window, operand 2, single buffered']
    #allocation8 [shape = 'u8[8192]{0}', space=vmem, size = 0x2000, scoped, tag = 'output window, operand 0, single buffered']
    %9 = vsyncpa [#allocation3], 0
    %10 = vsyncpa [#allocation6], 0
    %11 = vsyncpa [#allocation4], 0
    // Predicated region
    $region2: #{tpu_custom_call.1} parent=1 // pred_check
      _
    $region3: #{tpu_custom_call.1} parent=1 // pred_check_branch
      %13 = sbr.rel (0) target = $region5
    $region4: #{tpu_custom_call.1} parent=1 // pred_region
      %s15 = ssub.s32 256, 256
      %16 = vsyncadd [#allocation3], %s15
      %s17 = sshll.u32 [#allocation2], 4
      %s18 = int_to_ptr.vmem [resolvable:$true] %s17
      %23 = dma.hbm_to_vmem [thread:$0]  %s0, 256, %s18, [#allocation3], 128, 128, 8
    $region5: #{tpu_custom_call.1} parent=1 // pred_fallthru
      _
    // Predicated region
    $region6: #{tpu_custom_call.1} parent=1 // pred_check
      _
    $region7: #{tpu_custom_call.1} parent=1 // pred_check_branch
      %25 = sbr.rel (0) target = $region9
    $region8: #{tpu_custom_call.1} parent=1 // pred_region
      %s27 = ssub.s32 256, 256
      %28 = vsyncadd [#allocation6], %s27
      %s29 = sshll.u32 [#allocation5], 4
      %s30 = int_to_ptr.vmem [resolvable:$true] %s29
      %35 = dma.hbm_to_vmem [thread:$0]  %s1, 256, %s30, [#allocation6], 128, 128, 8
    $region9: #{tpu_custom_call.1} parent=1 // pred_fallthru
      _
    // Predicated region
    $region10: #{tpu_custom_call.1} parent=1 // pred_check
      _
    $region11: #{tpu_custom_call.1} parent=1 // pred_check_branch
      %37 = sbr.rel (0) target = $region13
    $region12: #{tpu_custom_call.1} parent=1 // pred_region
      %s39 = ssub.s32 256, 256
      %40 = vsyncadd [#allocation6], %s39
      %s41 = sshll.u32 [#allocation7], 4
      %s42 = int_to_ptr.vmem [resolvable:$true] %s41
      %47 = dma.hbm_to_vmem [thread:$0]  %s2, 256, %s42, [#allocation6], 128, 128, 8
    $region13: #{tpu_custom_call.1} parent=1 // pred_fallthru
      _
    // Predicated region
    $region14: #{tpu_custom_call.1} parent=1 // pred_check
      _
    $region15: #{tpu_custom_call.1} parent=1 // pred_check_branch
      %49 = sbr.rel (0) target = $region17
    $region16: #{tpu_custom_call.1} parent=1 // pred_region
      _
    $region17: #{tpu_custom_call.1} parent=1 // pred_fallthru
      _
    // Predicated region
    $region18: #{tpu_custom_call.1} parent=1 // pred_check
      _
    $region19: #{tpu_custom_call.1} parent=1 // pred_check_branch
      %51 = sbr.rel (0) target = $region21
    $region20: #{tpu_custom_call.1} parent=1 // pred_region
      %52 = dma.done [#allocation3], 256
    $region21: #{tpu_custom_call.1} parent=1 // pred_fallthru
      _
    // Predicated region
    $region22: #{tpu_custom_call.1} parent=1 // pred_check
      _
    $region23: #{tpu_custom_call.1} parent=1 // pred_check_branch
      %54 = sbr.rel (0) target = $region25
    $region24: #{tpu_custom_call.1} parent=1 // pred_region
      %55 = dma.done [#allocation6], 256
    $region25: #{tpu_custom_call.1} parent=1 // pred_fallthru
      _
    // Predicated region
    $region26: #{tpu_custom_call.1} parent=1 // pred_check
      _
    $region27: #{tpu_custom_call.1} parent=1 // pred_check_branch
      %57 = sbr.rel (0) target = $region29
    $region28: #{tpu_custom_call.1} parent=1 // pred_region
      %58 = dma.done [#allocation6], 256
    $region29: #{tpu_custom_call.1} parent=1 // pred_fallthru
      _
    %v59 = vld [vmem:[#allocation2] sm:$0xff]
    %v60 = vld [vmem:[#allocation2 + $0x8] sm:$0xff]
    %v61 = vld [vmem:[#allocation5] sm:$0xff]
    %v62 = vld [vmem:[#allocation5 + $0x8] sm:$0xff]
    %v63 = vld [vmem:[#allocation7] sm:$0xff]
    %v64 = vld [vmem:[#allocation7 + $0x8] sm:$0xff]
    %v65 = vadd.f32 %v61, %v63
    %v66 = vadd.f32 %v62, %v64
    %v67 = vld [vmem:[%s3] sm:$0x7]
    %vm68 = vcmask 261120
    %v69 = vsel %vm68, %v59, 0.0
    %70 = vadd.xlane.f32.xlu0 %v69
    %v71 = vpop.xlane.xlu0 %70
    %v72 = vsel %vm68, %v60, 0.0
    %73 = vadd.xlane.f32.xlu0 %v72
    %v74 = vpop.xlane.xlu0 %73
    %v75 = vmul.f32 %v71, 0.03125
    %v76 = vmul.f32 %v74, 0.03125
    %v77 = vsub.f32 %v59, %v75
    %v78 = vsub.f32 %v60, %v76
    %v79 = vmul.f32 %v77, %v77
    %v80 = vmul.f32 %v78, %v78
    %v81 = vsel %vm68, %v79, 0.0
    %82 = vadd.xlane.f32.xlu0 %v81
    %v83 = vpop.xlane.xlu0 %82
    %v84 = vsel %vm68, %v80, 0.0
    %85 = vadd.xlane.f32.xlu0 %v84
    %v86 = vpop.xlane.xlu0 %85
    %v87 = vmul.f32 %v83, 0.03125
    %v88 = vmul.f32 %v86, 0.03125
    %v89 = vadd.f32 %v87, 1e-05
    %v90 = vadd.f32 %v88, 1e-05
    %v91 = vrsqrt.pop %v89
    %v92 = vrsqrt.pop %v90
    %v93 = vmul.f32 %v77, %v91
    %v94 = vmul.f32 %v78, %v92
    %v95 = vlaneseq
    %v96 = vshrl.u32 %v95, 7
    %v97 = vsub.s32 0, %v96
    %v98 = vrot.slane %v67, %v97
    %v99 = vmul.f32 %v93, %v98
    %v100 = vmul.f32 %v94, %v98
    %v101 = vsel %vm68, %v65, 0.0
    %102 = vadd.xlane.f32.xlu0 %v101
    %v103 = vpop.xlane.xlu0 %102
    %v104 = vsel %vm68, %v66, 0.0
    %105 = vadd.xlane.f32.xlu0 %v104
    %v106 = vpop.xlane.xlu0 %105
    %v107 = vmul.f32 %v103, 0.03125
    %v108 = vmul.f32 %v106, 0.03125
    %v109 = vsub.f32 %v65, %v107
    %v110 = vsub.f32 %v66, %v108
    %v111 = vmul.f32 %v109, %v109
    %v112 = vmul.f32 %v110, %v110
    %v113 = vsel %vm68, %v111, 0.0
    %114 = vadd.xlane.f32.xlu0 %v113
    %v115 = vpop.xlane.xlu0 %114
    %v116 = vsel %vm68, %v112, 0.0
    %117 = vadd.xlane.f32.xlu0 %v116
    %v118 = vpop.xlane.xlu0 %117
    %v119 = vmul.f32 %v115, 0.03125
    %v120 = vmul.f32 %v118, 0.03125
    %v121 = vadd.f32 %v119, 1e-05
    %v122 = vadd.f32 %v120, 1e-05
    %v123 = vrsqrt.pop %v121
    %v124 = vrsqrt.pop %v122
    %v125 = vmul.f32 %v109, %v123
    %v126 = vmul.f32 %v110, %v124
    %v127 = vlaneseq
    %v128 = vshrl.u32 %v127, 7
    %v129 = vsub.s32 1, %v128
    %v130 = vrot.slane %v67, %v129
    %v131 = vmul.f32 %v125, %v130
    %v132 = vmul.f32 %v126, %v130
    %v133 = vadd.f32 %v99, %v131
    %v134 = vadd.f32 %v100, %v132
    %v135 = vlaneseq
    %v136 = vshrl.u32 %v135, 7
    %v137 = vsub.s32 2, %v136
    %v138 = vrot.slane %v67, %v137
    %v139 = vadd.f32 %v133, %v138
    %v140 = vadd.f32 %v134, %v138
    %141 = vst.msk [vmem:[#allocation8] sm:$0xff] %vm68, %v139
    %142 = vst.msk [vmem:[#allocation8 + $0x8] sm:$0xff] %vm68, %v140
    // Predicated region
    $region30: #{tpu_custom_call.1} parent=1 // pred_check
      _
    $region31: #{tpu_custom_call.1} parent=1 // pred_check_branch
      %144 = sbr.rel (0) target = $region33
    $region32: #{tpu_custom_call.1} parent=1 // pred_region
      %s146 = ssub.s32 256, 256
      %147 = vsyncadd [#allocation4], %s146
      %s148 = sshll.u32 [#allocation8], 4
      %s149 = int_to_ptr.vmem [resolvable:$true] %s148
      %154 = dma.vmem_to_hbm [thread:$0]  %s149, 256, %s4, [#allocation4], 128, 128, 8
    $region33: #{tpu_custom_call.1} parent=1 // pred_fallthru
      _
    // Predicated region
    $region34: #{tpu_custom_call.1} parent=1 // pred_check
      _
    $region35: #{tpu_custom_call.1} parent=1 // pred_check_branch
      %156 = sbr.rel (0) target = $region37
    $region36: #{tpu_custom_call.1} parent=1 // pred_region
      %157 = dma.done [#allocation4], 256
    $region37: #{tpu_custom_call.1} parent=1 // pred_fallthru
      _
    %158 = vsyncpa [#allocation3], 1
    %159 = vsyncpa [#allocation6], 1
    %160 = vsyncpa [#allocation4], 1

</llo_original>
